<compile_context>
chip_gen: v6e
topology: v6e:2x2x1
jax: 0.10.0
libtpu: 0.0.40
codegen_flags: <defaults>
</compile_context>

<pallas_src>
import functools

import jax
import jax.numpy as jnp
from jax.experimental import pallas as pl
from jax.experimental.pallas import tpu as pltpu


HIDDEN = 256
MIN_TILE = 256    # multiple of the 256-wide v6e/v7x MXU (and 2x the v5e 128 MXU)
MAX_TILE = 1024   # per-tile VMEM stays ~2-4 MiB -> fits every generation's scoped default


def _round_up(n, m):
    return ((n + m - 1) // m) * m


def _choose_batch_tile(batch):
    """Largest tile in [MIN_TILE, MAX_TILE] (multiple of 256) that still keeps
    >= 2 grid steps, so v7x's two TensorCores both get work while per-step
    overhead is amortized."""
    half = _round_up(pl.cdiv(batch, 2), MIN_TILE)
    return max(MIN_TILE, min(MAX_TILE, half))


def _actor_kernel(x_ref, w1_ref, b1_ref, w2_ref, b2_ref, wh_ref, bh_ref,
                  lo_ref, hi_ref, out_ref):
    # fc1 + relu (bf16 inputs, f32 accumulate on the MXU)
    x = x_ref[...].astype(jnp.bfloat16)
    h1 = jnp.dot(x, w1_ref[...], preferred_element_type=jnp.float32) + b1_ref[...]
    h1 = jnp.maximum(h1, 0.0).astype(jnp.bfloat16)

    # fc2 + relu
    h2 = jnp.dot(h1, w2_ref[...], preferred_element_type=jnp.float32) + b2_ref[...]
    h2 = jnp.maximum(h2, 0.0).astype(jnp.bfloat16)

    # fused heads: columns [0, A) = mean, [A, 2A) = log_std, rest = zero pad
    heads = jnp.dot(h2, wh_ref[...], preferred_element_type=jnp.float32) + bh_ref[...]

    # Per-lane clamp: lo/hi are [-20, 2] on log_std lanes, +-finfo.max elsewhere.
    out_ref[...] = jnp.minimum(jnp.maximum(heads, lo_ref[...]), hi_ref[...])


def pack_params(params):
    """Convert raw [in, out] f32 params into the fused / padded / bf16 kernel
    layout: (w1_bf16, b1, w2_bf16, b2, w_heads_bf16, b_heads, lo, hi)."""
    w1, b1, w2, b2, wm, bm, ws, bs = params
    action_dim = wm.shape[1]
    pad = max(128, _round_up(2 * action_dim, 128))  # lane-dense output width
    assert pad >= 2 * action_dim, "fused head pad must hold mean and log_std"

    wh = jnp.concatenate([wm, ws], axis=1)
    bh = jnp.concatenate([bm, bs], axis=1)
    wh = jnp.pad(wh, ((0, 0), (0, pad - 2 * action_dim)))
    bh = jnp.pad(bh, ((0, 0), (0, pad - 2 * action_dim)))

    # Precomputed per-lane clamp bounds (replaces iota/compare/select in-kernel).
    big = float(jnp.finfo(jnp.float32).max)
    lane = jnp.arange(pad)
    is_log_std = (lane >= action_dim) & (lane < 2 * action_dim)
    lo = jnp.where(is_log_std, -20.0, -big).astype(jnp.float32)[None, :]
    hi = jnp.where(is_log_std, 2.0, big).astype(jnp.float32)[None, :]

    bf = jnp.bfloat16
    return (w1.astype(bf), b1, w2.astype(bf), b2, wh.astype(bf), bh, lo, hi)


@functools.partial(jax.jit, static_argnames=("action_dim",))
def simple_actor_forward(state, packed, *, action_dim):
    """state: [B, state_dim] f32. Returns (mean, log_std), each [B, action_dim] f32."""
    w1, b1, w2, b2, wh, bh, lo, hi = packed
    batch, state_dim = state.shape
    hidden = w1.shape[1]
    pad = wh.shape[1]

    def cost(rows):
        flops = 2 * rows * (state_dim * hidden + hidden * hidden + hidden * pad)
        bytes_accessed = (rows * state_dim * 4
                          + sum(int(p.size) * p.dtype.itemsize for p in packed)
                          + rows * pad * 4)
        return pl.CostEstimate(flops=flops, transcendentals=0,
                               bytes_accessed=bytes_accessed)

    if batch > MIN_TILE:
        # Gridded path: any batch above one tile, padded up to a tile multiple.
        tile = _choose_batch_tile(batch)
        grid = pl.cdiv(batch, tile)
        padded = grid * tile
        x = state if padded == batch else jnp.pad(state, ((0, padded - batch), (0, 0)))
        const = lambda i: (0, 0)  # weights/biases/bounds stay VMEM-resident
        fused = pl.pallas_call(
            _actor_kernel,
            out_shape=jax.ShapeDtypeStruct((padded, pad), jnp.float32),
            grid=(grid,),
            in_specs=[
                pl.BlockSpec((tile, state_dim), lambda i: (i, 0)),
                pl.BlockSpec((state_dim, hidden), const),
                pl.BlockSpec((1, hidden), const),
                pl.BlockSpec((hidden, hidden), const),
                pl.BlockSpec((1, hidden), const),
                pl.BlockSpec((hidden, pad), const),
                pl.BlockSpec((1, pad), const),
                pl.BlockSpec((1, pad), const),
                pl.BlockSpec((1, pad), const),
            ],
            out_specs=pl.BlockSpec((tile, pad), lambda i: (i, 0)),
            compiler_params=pltpu.CompilerParams(
                dimension_semantics=("parallel",),
                vmem_limit_bytes=32 * 1024 * 1024),
            cost_estimate=cost(padded),
        )(x, *packed)
    else:
        # Tiny problem: one full-extent VMEM block, no grid (grid = serial loop
        # on TPU and would only add per-step overhead here).
        vmem = lambda: pl.BlockSpec(memory_space=pltpu.MemorySpace.VMEM)
        fused = pl.pallas_call(
            _actor_kernel,
            out_shape=jax.ShapeDtypeStruct((batch, pad), jnp.float32),
            in_specs=[vmem() for _ in range(9)],
            out_specs=vmem(),
            cost_estimate=cost(batch),
        )(state, *packed)

    heads = fused[:batch, :2 * action_dim]  # one contiguous slice of the slab
    return heads[:, :action_dim], heads[:, action_dim:]


def init_params(key, state_dim, action_dim):
    """Deterministic init mimicking PyTorch nn.Linear default
    (uniform(-1/sqrt(fan_in), 1/sqrt(fan_in))). Weights stored as [in, out]."""
    def linear(k, fan_in, fan_out):
        kw, kb = jax.random.split(k)
        bound = 1.0 / jnp.sqrt(jnp.float32(fan_in))
        w = jax.random.uniform(kw, (fan_in, fan_out), jnp.float32, -bound, bound)
        b = jax.random.uniform(kb, (1, fan_out), jnp.float32, -bound, bound)
        return w, b

    k1, k2, k3, k4 = jax.random.split(key, 4)
    w1, b1 = linear(k1, state_dim, HIDDEN)
    w2, b2 = linear(k2, HIDDEN, HIDDEN)
    wm, bm = linear(k3, HIDDEN, action_dim)
    ws, bs = linear(k4, HIDDEN, action_dim)
    return (w1, b1, w2, b2, wm, bm, ws, bs)


def _reference_forward(state, params):
    """Pure-JAX reference mirroring the kernel's bf16-input / f32-accumulate
    matmul strategy (the kernel intentionally uses the native MXU bf16 path;
    not bit-identical to an all-f32 PyTorch SimpleActor)."""
    w1, b1, w2, b2, wm, bm, ws, bs = params
    bf, f32 = jnp.bfloat16, jnp.float32
    h1 = jnp.maximum(
        jnp.dot(state.astype(bf), w1.astype(bf), preferred_element_type=f32) + b1, 0.0)
    h2 = jnp.maximum(
        jnp.dot(h1.astype(bf), w2.astype(bf), preferred_element_type=f32) + b2, 0.0)
    mean = jnp.dot(h2.astype(bf), wm.astype(bf), preferred_element_type=f32) + bm
    log_std = jnp.clip(
        jnp.dot(h2.astype(bf), ws.astype(bf), preferred_element_type=f32) + bs,
        -20.0, 2.0)
    return mean, log_std


if __name__ == "__main__":
    key = jax.random.PRNGKey(0)
    k1, k2, k3, kp = jax.random.split(key, 4)

    state_dim, action_dim = 32, 8
    params = init_params(kp, state_dim, action_dim)
    packed = pack_params(params)

    # batch=8    -> single full-extent block (no grid)
    # batch=384  -> gridded path, tile=256, grid=2, padded to 512 (exercises padding)
    # batch=2048 -> gridded path, tile=1024, grid=2 (exercises the large adaptive tile)
    for bkey, batch in ((k1, 8), (k2, 384), (k3, 2048)):
        state = jax.random.normal(bkey, (batch, state_dim), jnp.float32)
        mean, log_std = simple_actor_forward(state, packed, action_dim=action_dim)
        jax.block_until_ready((mean, log_std))

        ref_mean, ref_log_std = _reference_forward(state, params)
        assert mean.shape == (batch, action_dim)
        assert log_std.shape == (batch, action_dim)
        assert jnp.allclose(mean, ref_mean, atol=1e-3, rtol=1e-3)
        assert jnp.allclose(log_std, ref_log_std, atol=1e-3, rtol=1e-3)
        assert float(log_std.max()) <= 2.0 and float(log_std.min()) >= -20.0

    print("KERNEL_OK")
</pallas_src>

<mosaic_0001>
module attributes {stable_mosaic.version = 11 : i64} {
  func.func @_actor_kernel(%arg0: memref<8x32xf32, #tpu.memory_space<vmem>>, %arg1: memref<32x256xbf16, #tpu.memory_space<vmem>>, %arg2: memref<1x256xf32, #tpu.memory_space<vmem>>, %arg3: memref<256x256xbf16, #tpu.memory_space<vmem>>, %arg4: memref<1x256xf32, #tpu.memory_space<vmem>>, %arg5: memref<256x128xbf16, #tpu.memory_space<vmem>>, %arg6: memref<1x128xf32, #tpu.memory_space<vmem>>, %arg7: memref<1x128xf32, #tpu.memory_space<vmem>>, %arg8: memref<1x128xf32, #tpu.memory_space<vmem>>, %arg9: memref<8x128xf32, #tpu.memory_space<vmem>>) attributes {dimension_semantics = [], scalar_prefetch = 0 : i64, scratch_operands = 0 : i64, tpu.core_type = #tpu.core_type<tc>} {
    %c0 = arith.constant 0 : index
    %c0_0 = arith.constant 0 : index
    %0 = vector.load %arg0[%c0, %c0_0] : memref<8x32xf32, #tpu.memory_space<vmem>>, vector<8x32xf32>
    %1 = arith.truncf %0 : vector<8x32xf32> to vector<8x32xbf16>
    %c0_1 = arith.constant 0 : index
    %c0_2 = arith.constant 0 : index
    %2 = vector.load %arg1[%c0_1, %c0_2] : memref<32x256xbf16, #tpu.memory_space<vmem>>, vector<32x256xbf16>
    %cst = arith.constant dense<0.000000e+00> : vector<8x256xf32>
    %3 = tpu.matmul %1, %2, %cst {dimension_numbers = #tpu.dot_dimension_numbers<[1], [0], [0], [1], [0, 0, 1, 1], [], []>} : vector<8x32xbf16>, vector<32x256xbf16>, vector<8x256xf32> -> vector<8x256xf32>
    %c0_3 = arith.constant 0 : index
    %c0_4 = arith.constant 0 : index
    %4 = vector.load %arg2[%c0_3, %c0_4] : memref<1x256xf32, #tpu.memory_space<vmem>>, vector<1x256xf32>
    %5 = vector.broadcast %4 : vector<1x256xf32> to vector<8x256xf32>
    %6 = arith.addf %3, %5 : vector<8x256xf32>
    %cst_5 = arith.constant 0.000000e+00 : f32
    %7 = vector.broadcast %cst_5 : f32 to vector<8x256xf32>
    %8 = arith.maximumf %6, %7 : vector<8x256xf32>
    %9 = arith.truncf %8 : vector<8x256xf32> to vector<8x256xbf16>
    %c0_6 = arith.constant 0 : index
    %c0_7 = arith.constant 0 : index
    %10 = vector.load %arg3[%c0_6, %c0_7] : memref<256x256xbf16, #tpu.memory_space<vmem>>, vector<256x256xbf16>
    %cst_8 = arith.constant dense<0.000000e+00> : vector<8x256xf32>
    %11 = tpu.matmul %9, %10, %cst_8 {dimension_numbers = #tpu.dot_dimension_numbers<[1], [0], [0], [1], [0, 0, 1, 1], [], []>} : vector<8x256xbf16>, vector<256x256xbf16>, vector<8x256xf32> -> vector<8x256xf32>
    %c0_9 = arith.constant 0 : index
    %c0_10 = arith.constant 0 : index
    %12 = vector.load %arg4[%c0_9, %c0_10] : memref<1x256xf32, #tpu.memory_space<vmem>>, vector<1x256xf32>
    %13 = vector.broadcast %12 : vector<1x256xf32> to vector<8x256xf32>
    %14 = arith.addf %11, %13 : vector<8x256xf32>
    %cst_11 = arith.constant 0.000000e+00 : f32
    %15 = vector.broadcast %cst_11 : f32 to vector<8x256xf32>
    %16 = arith.maximumf %14, %15 : vector<8x256xf32>
    %17 = arith.truncf %16 : vector<8x256xf32> to vector<8x256xbf16>
    %c0_12 = arith.constant 0 : index
    %c0_13 = arith.constant 0 : index
    %18 = vector.load %arg5[%c0_12, %c0_13] : memref<256x128xbf16, #tpu.memory_space<vmem>>, vector<256x128xbf16>
    %cst_14 = arith.constant dense<0.000000e+00> : vector<8x128xf32>
    %19 = tpu.matmul %17, %18, %cst_14 {dimension_numbers = #tpu.dot_dimension_numbers<[1], [0], [0], [1], [0, 0, 1, 1], [], []>} : vector<8x256xbf16>, vector<256x128xbf16>, vector<8x128xf32> -> vector<8x128xf32>
    %c0_15 = arith.constant 0 : index
    %c0_16 = arith.constant 0 : index
    %20 = vector.load %arg6[%c0_15, %c0_16] : memref<1x128xf32, #tpu.memory_space<vmem>>, vector<1x128xf32>
    %21 = vector.broadcast %20 : vector<1x128xf32> to vector<8x128xf32>
    %22 = arith.addf %19, %21 : vector<8x128xf32>
    %c0_17 = arith.constant 0 : index
    %c0_18 = arith.constant 0 : index
    %23 = vector.load %arg7[%c0_17, %c0_18] : memref<1x128xf32, #tpu.memory_space<vmem>>, vector<1x128xf32>
    %24 = vector.broadcast %23 : vector<1x128xf32> to vector<8x128xf32>
    %25 = arith.maximumf %22, %24 : vector<8x128xf32>
    %c0_19 = arith.constant 0 : index
    %c0_20 = arith.constant 0 : index
    %26 = vector.load %arg8[%c0_19, %c0_20] : memref<1x128xf32, #tpu.memory_space<vmem>>, vector<1x128xf32>
    %27 = vector.broadcast %26 : vector<1x128xf32> to vector<8x128xf32>
    %28 = arith.minimumf %25, %27 : vector<8x128xf32>
    %c0_21 = arith.constant 0 : index
    %c0_22 = arith.constant 0 : index
    %29 = vector.load %arg9[%c0_21, %c0_22] : memref<8x128xf32, #tpu.memory_space<vmem>>, vector<8x128xf32>
    tpu.vector_store %arg9[%c0_21, %c0_22], %28 {strides = array<i32>} : memref<8x128xf32, #tpu.memory_space<vmem>>, vector<8x128xf32>,
    return
  }
}

</mosaic_0001>

<llo_original>
// kernel: simple_actor_forward.1
$region0: #{simple_actor_forward.1}
  #allocation0 [shape = 'u32[]', space=smem, size = 0x4, offset = 0x4, fixed_abs, tag = 'smem constant byte address 0x4 - core index']
  #allocation1 [shape = 'u32[144,128]{1,0:T(1,128)}', space=vmem, size = 0x12000, scoped, tag = 'internal scratch']
  %s0 = inlined_call_operand.hbm [shape: f32[8,32], index: 0, kind: input, shape index: {}]
  %s1 = inlined_call_operand.hbm [shape: bf16[32,256], index: 1, kind: input, shape index: {}]
  %s2 = inlined_call_operand.vmem [shape: f32[1,256], index: 2, kind: input, shape index: {}]
  %s3 = inlined_call_operand.hbm [shape: bf16[256,256], index: 3, kind: input, shape index: {}]
  %s4 = inlined_call_operand.vmem [shape: f32[1,256], index: 4, kind: input, shape index: {}]
  %s5 = inlined_call_operand.hbm [shape: bf16[256,128], index: 5, kind: input, shape index: {}]
  %s6 = inlined_call_operand.vmem [shape: f32[1,128], index: 6, kind: input, shape index: {}]
  %s7 = inlined_call_operand.vmem [shape: f32[1,128], index: 7, kind: input, shape index: {}]
  %s8 = inlined_call_operand.vmem [shape: f32[1,128], index: 8, kind: input, shape index: {}]
  %s9 = inlined_call_operand.vmem [shape: f32[8,128], index: 9, kind: output, shape index: {}]
  %s10 = sld [smem:[#allocation0]]
  $region62: #{simple_actor_forward.1} parent=0
    _
  %s12 = ssub.s32 1, %s10
  %s13 = scalar_select 0, %s12, %s10
  $region1: #{simple_actor_forward.1} parent=0
    #allocation2 [shape = 'u8[4096]{0}', space=vmem, size = 0x1000, scoped, tag = 'input window, operand 0, single buffered']
    #allocation3 [shape = 's32[1]{0}', space=sflag, size = 0x4, scoped, tag = 'scoped memory for simple_actor_forward.1']
    #allocation4 [shape = 'u8[16384]{0}', space=vmem, size = 0x4000, scoped, tag = 'input window, operand 1, single buffered']
    #allocation5 [shape = 's32[1]{0}', space=sflag, size = 0x4, scoped, tag = 'scoped memory for simple_actor_forward.1']
    #allocation6 [shape = 'u8[131072]{0}', space=vmem, size = 0x20000, scoped, tag = 'input window, operand 3, single buffered']
    #allocation7 [shape = 'u8[65536]{0}', space=vmem, size = 0x10000, scoped, tag = 'input window, operand 5, single buffered']
    #allocation8 [shape = 's32[1]{0}', space=sflag, size = 0x4, scoped, tag = 'scoped memory for simple_actor_forward.1']
    %14 = vsyncpa [#allocation3], 0
    %15 = vsyncpa [#allocation5], 0
    %16 = vsyncpa [#allocation8], 0
    // Predicated region
    $region2: #{simple_actor_forward.1} parent=1 // pred_check
      _
    $region3: #{simple_actor_forward.1} parent=1 // pred_check_branch
      %18 = sbr.rel (0) target = $region5
    $region4: #{simple_actor_forward.1} parent=1 // pred_region
      %s20 = ssub.s32 128, 128
      %21 = vsyncadd [#allocation3], %s20
      %s23 = sshll.u32 [#allocation2], 4
      %s24 = int_to_ptr.vmem [resolvable:$true] %s23
      %26 = dma.hbm_to_vmem [thread:$0]  %s0, 128, %s24, [#allocation3]
    $region5: #{simple_actor_forward.1} parent=1 // pred_fallthru
      _
    // Predicated region
    $region6: #{simple_actor_forward.1} parent=1 // pred_check
      _
    $region7: #{simple_actor_forward.1} parent=1 // pred_check_branch
      %28 = sbr.rel (0) target = $region9
    $region8: #{simple_actor_forward.1} parent=1 // pred_region
      %s30 = ssub.s32 512, 512
      %31 = vsyncadd [#allocation5], %s30
      %s32 = sshll.u32 [#allocation4], 4
      %s33 = int_to_ptr.vmem [resolvable:$true] %s32
      %38 = dma.hbm_to_vmem [thread:$0]  %s1, 512, %s33, [#allocation5], 128, 128, 8
    $region9: #{simple_actor_forward.1} parent=1 // pred_fallthru
      _
    // Predicated region
    $region10: #{simple_actor_forward.1} parent=1 // pred_check
      _
    $region11: #{simple_actor_forward.1} parent=1 // pred_check_branch
      %40 = sbr.rel (0) target = $region13
    $region12: #{simple_actor_forward.1} parent=1 // pred_region
      _
    $region13: #{simple_actor_forward.1} parent=1 // pred_fallthru
      _
    // Predicated region
    $region14: #{simple_actor_forward.1} parent=1 // pred_check
      _
    $region15: #{simple_actor_forward.1} parent=1 // pred_check_branch
      %42 = sbr.rel (0) target = $region17
    $region16: #{simple_actor_forward.1} parent=1 // pred_region
      %s44 = ssub.s32 4096, 4096
      %45 = vsyncadd [#allocation5], %s44
      %s46 = sshll.u32 [#allocation6], 4
      %s47 = int_to_ptr.vmem [resolvable:$true] %s46
      %52 = dma.hbm_to_vmem [thread:$0]  %s3, 4096, %s47, [#allocation5], 128, 128, 8
    $region17: #{simple_actor_forward.1} parent=1 // pred_fallthru
      _
    // Predicated region
    $region18: #{simple_actor_forward.1} parent=1 // pred_check
      _
    $region19: #{simple_actor_forward.1} parent=1 // pred_check_branch
      %54 = sbr.rel (0) target = $region21
    $region20: #{simple_actor_forward.1} parent=1 // pred_region
      _
    $region21: #{simple_actor_forward.1} parent=1 // pred_fallthru
      _
    // Predicated region
    $region22: #{simple_actor_forward.1} parent=1 // pred_check
      _
    $region23: #{simple_actor_forward.1} parent=1 // pred_check_branch
      %56 = sbr.rel (0) target = $region25
    $region24: #{simple_actor_forward.1} parent=1 // pred_region
      %s58 = ssub.s32 2048, 2048
      %59 = vsyncadd [#allocation8], %s58
      %s60 = sshll.u32 [#allocation7], 4
      %s61 = int_to_ptr.vmem [resolvable:$true] %s60
      %66 = dma.hbm_to_vmem [thread:$0]  %s5, 2048, %s61, [#allocation8], 64, 64, 4
    $region25: #{simple_actor_forward.1} parent=1 // pred_fallthru
      _
    // Predicated region
    $region26: #{simple_actor_forward.1} parent=1 // pred_check
      _
    $region27: #{simple_actor_forward.1} parent=1 // pred_check_branch
      %68 = sbr.rel (0) target = $region29
    $region28: #{simple_actor_forward.1} parent=1 // pred_region
      _
    $region29: #{simple_actor_forward.1} parent=1 // pred_fallthru
      _
    // Predicated region
    $region30: #{simple_actor_forward.1} parent=1 // pred_check
      _
    $region31: #{simple_actor_forward.1} parent=1 // pred_check_branch
      %70 = sbr.rel (0) target = $region33
    $region32: #{simple_actor_forward.1} parent=1 // pred_region
      _
    $region33: #{simple_actor_forward.1} parent=1 // pred_fallthru
      _
    // Predicated region
    $region34: #{simple_actor_forward.1} parent=1 // pred_check
      _
    $region35: #{simple_actor_forward.1} parent=1 // pred_check_branch
      %72 = sbr.rel (0) target = $region37
    $region36: #{simple_actor_forward.1} parent=1 // pred_region
      _
    $region37: #{simple_actor_forward.1} parent=1 // pred_fallthru
      _
    // Predicated region
    $region38: #{simple_actor_forward.1} parent=1 // pred_check
      _
    $region39: #{simple_actor_forward.1} parent=1 // pred_check_branch
      %74 = sbr.rel (0) target = $region41
    $region40: #{simple_actor_forward.1} parent=1 // pred_region
      %75 = dma.done [#allocation3], 128
    $region41: #{simple_actor_forward.1} parent=1 // pred_fallthru
      _
    // Predicated region
    $region42: #{simple_actor_forward.1} parent=1 // pred_check
      _
    $region43: #{simple_actor_forward.1} parent=1 // pred_check_branch
      %77 = sbr.rel (0) target = $region45
    $region44: #{simple_actor_forward.1} parent=1 // pred_region
      %78 = dma.done [#allocation5], 512
    $region45: #{simple_actor_forward.1} parent=1 // pred_fallthru
      _
    // Predicated region
    $region46: #{simple_actor_forward.1} parent=1 // pred_check
      _
    $region47: #{simple_actor_forward.1} parent=1 // pred_check_branch
      %80 = sbr.rel (0) target = $region49
    $region48: #{simple_actor_forward.1} parent=1 // pred_region
      %81 = dma.done [#allocation5], 4096
    $region49: #{simple_actor_forward.1} parent=1 // pred_fallthru
      _
    // Predicated region
    $region50: #{simple_actor_forward.1} parent=1 // pred_check
      _
    $region51: #{simple_actor_forward.1} parent=1 // pred_check_branch
      %83 = sbr.rel (0) target = $region53
    $region52: #{simple_actor_forward.1} parent=1 // pred_region
      %84 = dma.done [#allocation8], 2048
    $region53: #{simple_actor_forward.1} parent=1 // pred_fallthru
      _
    %v86 = vld [vmem:[#allocation2] sm:$0xff]
    %v87 = vpack.c.bf16 %v86, %v86
    %v88 = vld [vmem:[#allocation4] sm:$0xff]
    %v89 = vld [vmem:[#allocation4 + $0x8] sm:$0xff]
    %v90 = vld [vmem:[#allocation4 + $0x10] sm:$0xff]
    %v91 = vld [vmem:[#allocation4 + $0x18] sm:$0xff]
    %v92 = vld [vmem:[%s2] sm:$0x3]
    %v94 = vlaneseq
    %v95 = vshrl.u32 %v94, 7
    %v96 = vsub.s32 0, %v95
    %v97 = vrot.slane %v92, %v96
    %v98 = vlaneseq
    %v99 = vshrl.u32 %v98, 7
    %v100 = vsub.s32 1, %v99
    %v101 = vrot.slane %v92, %v100
    %v108 = vunpack.c.l.b16 %v88
    %v109 = vunpack.c.h.b16 %v88
    %v110 = vunpack.c.l.b16 %v89
    %v111 = vunpack.c.h.b16 %v89
    %v112 = vunpack.c.l.b16 %v90
    %v113 = vunpack.c.h.b16 %v90
    %v114 = vunpack.c.l.b16 %v91
    %v115 = vunpack.c.h.b16 %v91
    %v116 = vpack.c.b16 %v110, %v108
    %v117 = vpack.c.b16 %v111, %v109
    %v118 = vpack.c.b16 %v114, %v112
    %v119 = vpack.c.b16 %v115, %v113
    %vm124 = vcmask 261120
    %v126 = vsel %vm124, %v87, 0
    %128 = vmatprep.subr.bf16.mxu0 0
    %129 = vmatpush1.bf16.msra.mxu0 0
    %130 = vmatprep.subr.bf16.mxu0 0
    %131 = vmatpush1.bf16.msra.mxu0 0
    %132 = vmatprep.subr.bf16.mxu0 0
    %133 = vmatpush1.bf16.msra.mxu0 0
    %134 = vmatprep.subr.bf16.mxu0 0
    %135 = vmatpush1.bf16.msra.mxu0 0
    %136 = vmatprep.subr.bf16.mxu0 0
    %137 = vmatpush1.bf16.msra.mxu0 0
    %138 = vmatprep.subr.bf16.mxu0 0
    %139 = vmatpush1.bf16.msra.mxu0 0
    %140 = vmatprep.subr.bf16.mxu0 %v119
    %141 = vmatpush1.bf16.msra.mxu0 %v118
    %142 = vmatprep.subr.bf16.mxu0 %v117
    %143 = vmatpush1.bf16.msra.mxu0 %v116
    %144 = vmatprep.subr.bf16.mxu0 0
    %145 = vmatpush2.bf16.msra.mxu0 0
    %146 = vmatprep.subr.bf16.mxu0 0
    %147 = vmatpush2.bf16.msra.mxu0 0
    %148 = vmatprep.subr.bf16.mxu0 0
    %149 = vmatpush2.bf16.msra.mxu0 0
    %150 = vmatprep.subr.bf16.mxu0 0
    %151 = vmatpush2.bf16.msra.mxu0 0
    %152 = vmatprep.subr.bf16.mxu0 0
    %153 = vmatpush2.bf16.msra.mxu0 0
    %154 = vmatprep.subr.bf16.mxu0 0
    %155 = vmatpush2.bf16.msra.mxu0 0
    %156 = vmatprep.subr.bf16.mxu0 0
    %157 = vmatpush2.bf16.msra.mxu0 0
    %158 = vmatprep.subr.bf16.mxu0 0
    %159 = vmatpush2.bf16.msra.mxu0 0
    %160 = vmatprep.mubr.bf16.mxu0 0
    %161 = vmatmul.mubr.bf16.gmra.mxu0 %v126
    %v162 = vpop.f32.mrf.mxu0
    %v163 = vadd.f32 %v97, %v162
    %v164 = vpop.f32.mrf.mxu0
    %v165 = vadd.f32 %v101, %v164
    %v166 = vpop.f32.mrf.mxu0
    %v167 = vpop.f32.mrf.mxu0
    %168 = vdwg.mxu0
    %v169 = vmax.f32 %v163, 0.0
    %v170 = vmax.f32 %v165, 0.0
    %v171 = vpack.c.bf16 %v169, %v169
    %v172 = vpack.c.bf16 %v170, %v170
    %v173 = vld [vmem:[#allocation6] sm:$0xff]
    %v174 = vld [vmem:[#allocation6 + $0x8] sm:$0xff]
    %v175 = vld [vmem:[#allocation6 + $0x10] sm:$0xff]
    %v176 = vld [vmem:[#allocation6 + $0x18] sm:$0xff]
    %v177 = vld [vmem:[#allocation6 + $0x20] sm:$0xff]
    %v178 = vld [vmem:[#allocation6 + $0x28] sm:$0xff]
    %v179 = vld [vmem:[#allocation6 + $0x30] sm:$0xff]
    %v180 = vld [vmem:[#allocation6 + $0x38] sm:$0xff]
    %v181 = vld [vmem:[#allocation6 + $0x40] sm:$0xff]
    %v182 = vld [vmem:[#allocation6 + $0x48] sm:$0xff]
    %v183 = vld [vmem:[#allocation6 + $0x50] sm:$0xff]
    %v184 = vld [vmem:[#allocation6 + $0x58] sm:$0xff]
    %v185 = vld [vmem:[#allocation6 + $0x60] sm:$0xff]
    %v186 = vld [vmem:[#allocation6 + $0x68] sm:$0xff]
    %v187 = vld [vmem:[#allocation6 + $0x70] sm:$0xff]
    %v188 = vld [vmem:[#allocation6 + $0x78] sm:$0xff]
    %v189 = vld [vmem:[#allocation6 + $0x80] sm:$0xff]
    %v190 = vld [vmem:[#allocation6 + $0x88] sm:$0xff]
    %v191 = vld [vmem:[#allocation6 + $0x90] sm:$0xff]
    %v192 = vld [vmem:[#allocation6 + $0x98] sm:$0xff]
    %v193 = vld [vmem:[#allocation6 + $0xa0] sm:$0xff]
    %v194 = vld [vmem:[#allocation6 + $0xa8] sm:$0xff]
    %v195 = vld [vmem:[#allocation6 + $0xb0] sm:$0xff]
    %v196 = vld [vmem:[#allocation6 + $0xb8] sm:$0xff]
    %v197 = vld [vmem:[#allocation6 + $0xc0] sm:$0xff]
    %v198 = vld [vmem:[#allocation6 + $0xc8] sm:$0xff]
    %v199 = vld [vmem:[#allocation6 + $0xd0] sm:$0xff]
    %v200 = vld [vmem:[#allocation6 + $0xd8] sm:$0xff]
    %v201 = vld [vmem:[#allocation6 + $0xe0] sm:$0xff]
    %v202 = vld [vmem:[#allocation6 + $0xe8] sm:$0xff]
    %v203 = vld [vmem:[#allocation6 + $0xf0] sm:$0xff]
    %v204 = vld [vmem:[#allocation6 + $0xf8] sm:$0xff]
    %v205 = vld [vmem:[%s4] sm:$0x3]
    %v207 = vlaneseq
    %v208 = vshrl.u32 %v207, 7
    %v209 = vsub.s32 0, %v208
    %v210 = vrot.slane %v205, %v209
    %v211 = vlaneseq
    %v212 = vshrl.u32 %v211, 7
    %v213 = vsub.s32 1, %v212
    %v214 = vrot.slane %v205, %v213
    %v249 = vunpack.c.l.b16 %v173
    %v250 = vunpack.c.h.b16 %v173
    %v251 = vunpack.c.l.b16 %v174
    %v252 = vunpack.c.h.b16 %v174
    %v253 = vunpack.c.l.b16 %v175
    %v254 = vunpack.c.h.b16 %v175
    %v255 = vunpack.c.l.b16 %v176
    %v256 = vunpack.c.h.b16 %v176
    %v257 = vunpack.c.l.b16 %v177
    %v258 = vunpack.c.h.b16 %v177
    %v259 = vunpack.c.l.b16 %v178
    %v260 = vunpack.c.h.b16 %v178
    %v261 = vunpack.c.l.b16 %v179
    %v262 = vunpack.c.h.b16 %v179
    %v263 = vunpack.c.l.b16 %v180
    %v264 = vunpack.c.h.b16 %v180
    %v265 = vunpack.c.l.b16 %v181
    %v266 = vunpack.c.h.b16 %v181
    %v267 = vunpack.c.l.b16 %v182
    %v268 = vunpack.c.h.b16 %v182
    %v269 = vunpack.c.l.b16 %v183
    %v270 = vunpack.c.h.b16 %v183
    %v271 = vunpack.c.l.b16 %v184
    %v272 = vunpack.c.h.b16 %v184
    %v273 = vunpack.c.l.b16 %v185
    %v274 = vunpack.c.h.b16 %v185
    %v275 = vunpack.c.l.b16 %v186
    %v276 = vunpack.c.h.b16 %v186
    %v277 = vunpack.c.l.b16 %v187
    %v278 = vunpack.c.h.b16 %v187
    %v279 = vunpack.c.l.b16 %v188
    %v280 = vunpack.c.h.b16 %v188
    %v281 = vunpack.c.l.b16 %v189
    %v282 = vunpack.c.h.b16 %v189
    %v283 = vunpack.c.l.b16 %v190
    %v284 = vunpack.c.h.b16 %v190
    %v285 = vunpack.c.l.b16 %v191
    %v286 = vunpack.c.h.b16 %v191
    %v287 = vunpack.c.l.b16 %v192
    %v288 = vunpack.c.h.b16 %v192
    %v289 = vunpack.c.l.b16 %v193
    %v290 = vunpack.c.h.b16 %v193
    %v291 = vunpack.c.l.b16 %v194
    %v292 = vunpack.c.h.b16 %v194
    %v293 = vunpack.c.l.b16 %v195
    %v294 = vunpack.c.h.b16 %v195
    %v295 = vunpack.c.l.b16 %v196
    %v296 = vunpack.c.h.b16 %v196
    %v297 = vunpack.c.l.b16 %v197
    %v298 = vunpack.c.h.b16 %v197
    %v299 = vunpack.c.l.b16 %v198
    %v300 = vunpack.c.h.b16 %v198
    %v301 = vunpack.c.l.b16 %v199
    %v302 = vunpack.c.h.b16 %v199
    %v303 = vunpack.c.l.b16 %v200
    %v304 = vunpack.c.h.b16 %v200
    %v305 = vunpack.c.l.b16 %v201
    %v306 = vunpack.c.h.b16 %v201
    %v307 = vunpack.c.l.b16 %v202
    %v308 = vunpack.c.h.b16 %v202
    %v309 = vunpack.c.l.b16 %v203
    %v310 = vunpack.c.h.b16 %v203
    %v311 = vunpack.c.l.b16 %v204
    %v312 = vunpack.c.h.b16 %v204
    %v313 = vpack.c.b16 %v251, %v249
    %v314 = vpack.c.b16 %v252, %v250
    %v315 = vpack.c.b16 %v255, %v253
    %v316 = vpack.c.b16 %v256, %v254
    %v317 = vpack.c.b16 %v259, %v257
    %v318 = vpack.c.b16 %v260, %v258
    %v319 = vpack.c.b16 %v263, %v261
    %v320 = vpack.c.b16 %v264, %v262
    %v321 = vpack.c.b16 %v267, %v265
    %v322 = vpack.c.b16 %v268, %v266
    %v323 = vpack.c.b16 %v271, %v269
    %v324 = vpack.c.b16 %v272, %v270
    %v325 = vpack.c.b16 %v275, %v273
    %v326 = vpack.c.b16 %v276, %v274
    %v327 = vpack.c.b16 %v279, %v277
    %v328 = vpack.c.b16 %v280, %v278
    %v329 = vpack.c.b16 %v283, %v281
    %v330 = vpack.c.b16 %v284, %v282
    %v331 = vpack.c.b16 %v287, %v285
    %v332 = vpack.c.b16 %v288, %v286
    %v333 = vpack.c.b16 %v291, %v289
    %v334 = vpack.c.b16 %v292, %v290
    %v335 = vpack.c.b16 %v295, %v293
    %v336 = vpack.c.b16 %v296, %v294
    %v337 = vpack.c.b16 %v299, %v297
    %v338 = vpack.c.b16 %v300, %v298
    %v339 = vpack.c.b16 %v303, %v301
    %v340 = vpack.c.b16 %v304, %v302
    %v341 = vpack.c.b16 %v307, %v305
    %v342 = vpack.c.b16 %v308, %v306
    %v343 = vpack.c.b16 %v311, %v309
    %v344 = vpack.c.b16 %v312, %v310
    %377 = vmatprep.subr.bf16.mxu0 %v328
    %378 = vmatpush1.bf16.msra.mxu0 %v327
    %379 = vmatprep.subr.bf16.mxu0 %v326
    %380 = vmatpush1.bf16.msra.mxu0 %v325
    %381 = vmatprep.subr.bf16.mxu0 %v324
    %382 = vmatpush1.bf16.msra.mxu0 %v323
    %383 = vmatprep.subr.bf16.mxu0 %v322
    %384 = vmatpush1.bf16.msra.mxu0 %v321
    %385 = vmatprep.subr.bf16.mxu0 %v320
    %386 = vmatpush1.bf16.msra.mxu0 %v319
    %387 = vmatprep.subr.bf16.mxu0 %v318
    %388 = vmatpush1.bf16.msra.mxu0 %v317
    %389 = vmatprep.subr.bf16.mxu0 %v316
    %390 = vmatpush1.bf16.msra.mxu0 %v315
    %391 = vmatprep.subr.bf16.mxu0 %v314
    %392 = vmatpush1.bf16.msra.mxu0 %v313
    %393 = vmatprep.subr.bf16.mxu0 %v344
    %394 = vmatpush2.bf16.msra.mxu0 %v343
    %395 = vmatprep.subr.bf16.mxu0 %v342
    %396 = vmatpush2.bf16.msra.mxu0 %v341
    %397 = vmatprep.subr.bf16.mxu0 %v340
    %398 = vmatpush2.bf16.msra.mxu0 %v339
    %399 = vmatprep.subr.bf16.mxu0 %v338
    %400 = vmatpush2.bf16.msra.mxu0 %v337
    %401 = vmatprep.subr.bf16.mxu0 %v336
    %402 = vmatpush2.bf16.msra.mxu0 %v335
    %403 = vmatprep.subr.bf16.mxu0 %v334
    %404 = vmatpush2.bf16.msra.mxu0 %v333
    %405 = vmatprep.subr.bf16.mxu0 %v332
    %406 = vmatpush2.bf16.msra.mxu0 %v331
    %407 = vmatprep.subr.bf16.mxu0 %v330
    %408 = vmatpush2.bf16.msra.mxu0 %v329
    %409 = vmatprep.mubr.bf16.mxu0 %v172
    %410 = vmatmul.mubr.bf16.gmra.mxu0 %v171
    %v411 = vpop.f32.mrf.mxu0
    %v412 = vadd.f32 %v210, %v411
    %v413 = vpop.f32.mrf.mxu0
    %v414 = vadd.f32 %v214, %v413
    %v415 = vpop.f32.mrf.mxu0
    %v416 = vpop.f32.mrf.mxu0
    %417 = vdwg.mxu0
    %v418 = vmax.f32 %v412, 0.0
    %v419 = vmax.f32 %v414, 0.0
    %v420 = vpack.c.bf16 %v418, %v418
    %v421 = vpack.c.bf16 %v419, %v419
    %v422 = vld [vmem:[#allocation7] sm:$0xf]
    %v423 = vld [vmem:[#allocation7 + $0x4] sm:$0xf]
    %v424 = vld [vmem:[#allocation7 + $0x8] sm:$0xf]
    %v425 = vld [vmem:[#allocation7 + $0xc] sm:$0xf]
    %v426 = vld [vmem:[#allocation7 + $0x10] sm:$0xf]
    %v427 = vld [vmem:[#allocation7 + $0x14] sm:$0xf]
    %v428 = vld [vmem:[#allocation7 + $0x18] sm:$0xf]
    %v429 = vld [vmem:[#allocation7 + $0x1c] sm:$0xf]
    %v430 = vld [vmem:[#allocation7 + $0x20] sm:$0xf]
    %v431 = vld [vmem:[#allocation7 + $0x24] sm:$0xf]
    %v432 = vld [vmem:[#allocation7 + $0x28] sm:$0xf]
    %v433 = vld [vmem:[#allocation7 + $0x2c] sm:$0xf]
    %v434 = vld [vmem:[#allocation7 + $0x30] sm:$0xf]
    %v435 = vld [vmem:[#allocation7 + $0x34] sm:$0xf]
    %v436 = vld [vmem:[#allocation7 + $0x38] sm:$0xf]
    %v437 = vld [vmem:[#allocation7 + $0x3c] sm:$0xf]
    %v438 = vld [vmem:[#allocation7 + $0x40] sm:$0xf]
    %v439 = vld [vmem:[#allocation7 + $0x44] sm:$0xf]
    %v440 = vld [vmem:[#allocation7 + $0x48] sm:$0xf]
    %v441 = vld [vmem:[#allocation7 + $0x4c] sm:$0xf]
    %v442 = vld [vmem:[#allocation7 + $0x50] sm:$0xf]
    %v443 = vld [vmem:[#allocation7 + $0x54] sm:$0xf]
    %v444 = vld [vmem:[#allocation7 + $0x58] sm:$0xf]
    %v445 = vld [vmem:[#allocation7 + $0x5c] sm:$0xf]
    %v446 = vld [vmem:[#allocation7 + $0x60] sm:$0xf]
    %v447 = vld [vmem:[#allocation7 + $0x64] sm:$0xf]
    %v448 = vld [vmem:[#allocation7 + $0x68] sm:$0xf]
    %v449 = vld [vmem:[#allocation7 + $0x6c] sm:$0xf]
    %v450 = vld [vmem:[#allocation7 + $0x70] sm:$0xf]
    %v451 = vld [vmem:[#allocation7 + $0x74] sm:$0xf]
    %v452 = vld [vmem:[#allocation7 + $0x78] sm:$0xf]
    %v453 = vld [vmem:[#allocation7 + $0x7c] sm:$0xf]
    %v454 = vld [vmem:[%s6] sm:$0x1]
    %v456 = vlaneseq
    %v457 = vshrl.u32 %v456, 7
    %v458 = vsub.s32 0, %v457
    %v459 = vrot.slane %v454, %v458
    %v493 = vunpack.c.l.b16 %v422
    %v494 = vunpack.c.l.b16 %v423
    %v495 = vunpack.c.l.b16 %v424
    %v496 = vunpack.c.l.b16 %v425
    %v497 = vunpack.c.l.b16 %v426
    %v498 = vunpack.c.l.b16 %v427
    %v499 = vunpack.c.l.b16 %v428
    %v500 = vunpack.c.l.b16 %v429
    %v501 = vunpack.c.l.b16 %v430
    %v502 = vunpack.c.l.b16 %v431
    %v503 = vunpack.c.l.b16 %v432
    %v504 = vunpack.c.l.b16 %v433
    %v505 = vunpack.c.l.b16 %v434
    %v506 = vunpack.c.l.b16 %v435
    %v507 = vunpack.c.l.b16 %v436
    %v508 = vunpack.c.l.b16 %v437
    %v509 = vunpack.c.l.b16 %v438
    %v510 = vunpack.c.l.b16 %v439
    %v511 = vunpack.c.l.b16 %v440
    %v512 = vunpack.c.l.b16 %v441
    %v513 = vunpack.c.l.b16 %v442
    %v514 = vunpack.c.l.b16 %v443
    %v515 = vunpack.c.l.b16 %v444
    %v516 = vunpack.c.l.b16 %v445
    %v517 = vunpack.c.l.b16 %v446
    %v518 = vunpack.c.l.b16 %v447
    %v519 = vunpack.c.l.b16 %v448
    %v520 = vunpack.c.l.b16 %v449
    %v521 = vunpack.c.l.b16 %v450
    %v522 = vunpack.c.l.b16 %v451
    %v523 = vunpack.c.l.b16 %v452
    %v524 = vunpack.c.l.b16 %v453
    %v525 = vpack.c.b16 %v494, %v493
    %v526 = vpack.c.b16 %v496, %v495
    %v527 = vpack.c.b16 %v498, %v497
    %v528 = vpack.c.b16 %v500, %v499
    %v529 = vpack.c.b16 %v502, %v501
    %v530 = vpack.c.b16 %v504, %v503
    %v531 = vpack.c.b16 %v506, %v505
    %v532 = vpack.c.b16 %v508, %v507
    %v533 = vpack.c.b16 %v510, %v509
    %v534 = vpack.c.b16 %v512, %v511
    %v535 = vpack.c.b16 %v514, %v513
    %v536 = vpack.c.b16 %v516, %v515
    %v537 = vpack.c.b16 %v518, %v517
    %v538 = vpack.c.b16 %v520, %v519
    %v539 = vpack.c.b16 %v522, %v521
    %v540 = vpack.c.b16 %v524, %v523
    %557 = vmatprep.subr.bf16.mxu0 0
    %558 = vmatpush1.bf16.msra.mxu0 %v532
    %559 = vmatprep.subr.bf16.mxu0 0
    %560 = vmatpush1.bf16.msra.mxu0 %v531
    %561 = vmatprep.subr.bf16.mxu0 0
    %562 = vmatpush1.bf16.msra.mxu0 %v530
    %563 = vmatprep.subr.bf16.mxu0 0
    %564 = vmatpush1.bf16.msra.mxu0 %v529
    %565 = vmatprep.subr.bf16.mxu0 0
    %566 = vmatpush1.bf16.msra.mxu0 %v528
    %567 = vmatprep.subr.bf16.mxu0 0
    %568 = vmatpush1.bf16.msra.mxu0 %v527
    %569 = vmatprep.subr.bf16.mxu0 0
    %570 = vmatpush1.bf16.msra.mxu0 %v526
    %571 = vmatprep.subr.bf16.mxu0 0
    %572 = vmatpush1.bf16.msra.mxu0 %v525
    %573 = vmatprep.subr.bf16.mxu0 0
    %574 = vmatpush2.bf16.msra.mxu0 %v540
    %575 = vmatprep.subr.bf16.mxu0 0
    %576 = vmatpush2.bf16.msra.mxu0 %v539
    %577 = vmatprep.subr.bf16.mxu0 0
    %578 = vmatpush2.bf16.msra.mxu0 %v538
    %579 = vmatprep.subr.bf16.mxu0 0
    %580 = vmatpush2.bf16.msra.mxu0 %v537
    %581 = vmatprep.subr.bf16.mxu0 0
    %582 = vmatpush2.bf16.msra.mxu0 %v536
    %583 = vmatprep.subr.bf16.mxu0 0
    %584 = vmatpush2.bf16.msra.mxu0 %v535
    %585 = vmatprep.subr.bf16.mxu0 0
    %586 = vmatpush2.bf16.msra.mxu0 %v534
    %587 = vmatprep.subr.bf16.mxu0 0
    %588 = vmatpush2.bf16.msra.mxu0 %v533
    %589 = vmatprep.mubr.bf16.mxu0 %v421
    %590 = vmatmul.mubr.bf16.gmra.mxu0 %v420
    %v591 = vpop.f32.mrf.mxu0
    %v592 = vadd.f32 %v459, %v591
    %v593 = vpop.f32.mrf.mxu0
    %v594 = vpop.f32.mrf.mxu0
    %v595 = vpop.f32.mrf.mxu0
    %596 = vdwg.mxu0
    %v597 = vld [vmem:[%s7] sm:$0x1]
    %v599 = vlaneseq
    %v600 = vshrl.u32 %v599, 7
    %v601 = vsub.s32 0, %v600
    %v602 = vrot.slane %v597, %v601
    %v604 = vmax.f32 %v592, %v602
    %v605 = vld [vmem:[%s8] sm:$0x1]
    %v607 = vlaneseq
    %v608 = vshrl.u32 %v607, 7
    %v609 = vsub.s32 0, %v608
    %v610 = vrot.slane %v605, %v609
    %v612 = vmin.f32 %v604, %v610
    %613 = vst [vmem:[%s9] sm:$0xff] %v612
    // Predicated region
    $region54: #{simple_actor_forward.1} parent=1 // pred_check
      _
    $region55: #{simple_actor_forward.1} parent=1 // pred_check_branch
      %615 = sbr.rel (0) target = $region57
    $region56: #{simple_actor_forward.1} parent=1 // pred_region
      _
    $region57: #{simple_actor_forward.1} parent=1 // pred_fallthru
      _
    // Predicated region
    $region58: #{simple_actor_forward.1} parent=1 // pred_check
      _
    $region59: #{simple_actor_forward.1} parent=1 // pred_check_branch
      %617 = sbr.rel (0) target = $region61
    $region60: #{simple_actor_forward.1} parent=1 // pred_region
      _
    $region61: #{simple_actor_forward.1} parent=1 // pred_fallthru
      _
    %618 = vsyncpa [#allocation3], 1
    %619 = vsyncpa [#allocation5], 1
    %620 = vsyncpa [#allocation8], 1

</llo_original>
